<compile_context>
chip_gen: v5e
topology: v5e:2x2
jax: 0.10.0
libtpu: 0.0.40
codegen_flags: <defaults>
</compile_context>

<pallas_src>
import functools

import jax
import jax.numpy as jnp
from jax.experimental import pallas as pl
from jax.experimental.pallas import tpu as pltpu

NEG_SLOPE = 0.01   # nn.LeakyReLU() default
LANE = 128         # TPU lane width


def _round_up(x, m):
    return (x + m - 1) // m * m


def _leaky_relu(h):
    return jnp.where(h > 0, h, NEG_SLOPE * h)


def make_nn_v_kernel(num_hidden):
    """Kernel factory: fused MLP with `num_hidden` (Linear + LeakyReLU) layers
    followed by a Linear(., 1) implemented as a VPU/XLU row reduction."""

    def kernel(*refs):
        x_ref = refs[0]
        o_ref = refs[-1]
        h = x_ref[...]
        idx = 1
        for _ in range(num_hidden):
            w_ref, b_ref = refs[idx], refs[idx + 1]
            idx += 2
            h = jnp.dot(h, w_ref[...], preferred_element_type=jnp.float32)
            h = _leaky_relu(h + b_ref[...])          # bias broadcast (1, H) -> (TB, H)
        w_out_ref, b_out_ref = refs[idx], refs[idx + 1]
        # Final Linear(H, 1): avoid a near-empty MXU pass; multiply on the VPU,
        # reduce across lanes on the XLU.
        out = jnp.sum(h * w_out_ref[...], axis=-1, keepdims=True)
        o_ref[...] = out + b_out_ref[...]

    return kernel


def prepare_params(params, lane=LANE):
    """One-time host-side prep.

    params: list of (W, b) in PyTorch layout (W: (out, in), b: (out,)).
    Returns a flat tuple of f32 arrays in kernel order:
        (w1, b1, ..., w_nh, b_nh, w_out_row, b_out)
    Hidden weights are transposed to (in, out) and zero-padded so every hidden
    width is a multiple of `lane`; the final layer is stored as a (1, H) row
    vector plus a (1, 1) bias.
    """
    num_hidden = len(params) - 1
    args = []
    prev = params[0][0].shape[1]  # original in_size (left unpadded)
    for i in range(num_hidden):
        W, b = params[i]
        fan_out, fan_in = W.shape
        out_p = _round_up(fan_out, lane)
        wt = jnp.asarray(W, jnp.float32).T                     # (in, out)
        w_pad = jnp.zeros((prev, out_p), jnp.float32).at[:fan_in, :fan_out].set(wt)
        b_pad = jnp.zeros((1, out_p), jnp.float32).at[0, :fan_out].set(
            jnp.asarray(b, jnp.float32))
        args.extend([w_pad, b_pad])
        prev = out_p
    Wf, bf = params[-1]
    fan_out, fan_in = Wf.shape
    assert fan_out == 1, "NN_V ends in Linear(inSize, 1)"
    w_row = jnp.zeros((1, prev), jnp.float32).at[0, :fan_in].set(
        jnp.asarray(Wf, jnp.float32)[0])
    b_out = jnp.asarray(bf, jnp.float32).reshape(1, 1)
    args.extend([w_row, b_out])
    return tuple(args)


@functools.partial(jax.jit, static_argnames=("tb_max",))
def nn_v_forward(x, prepped_args, *, tb_max=2048):
    """x: (B, inSize) f32.  prepped_args: output of prepare_params."""
    x = jnp.asarray(x, jnp.float32)
    B, in_size = x.shape
    num_hidden = (len(prepped_args) - 2) // 2

    # --- batch tiling: large tile (bounded), padded with zero rows if needed ---
    bp8 = _round_up(B, 8)
    TB = min(tb_max, bp8)
    Bp = _round_up(B, TB)
    if Bp != B:
        x = jnp.zeros((Bp, in_size), jnp.float32).at[:B].set(x)
    grid = (Bp // TB,)

    x_spec = pl.BlockSpec((TB, in_size), lambda i: (i, 0))
    o_spec = pl.BlockSpec((TB, 1), lambda i: (i, 0))
    # Weights / biases: full-array blocks, constant index_map -> VMEM-resident.
    w_specs = [pl.BlockSpec(a.shape, lambda i: (0, 0)) for a in prepped_args]

    # --- advisory cost estimate ---
    flops = 0
    prev = in_size
    for j in range(num_hidden):
        h_dim = prepped_args[2 * j].shape[1]
        flops += 2 * Bp * prev * h_dim
        prev = h_dim
    flops += 2 * Bp * prev  # final row-reduce layer
    bytes_accessed = (Bp * in_size * 4 + Bp * 4
                      + sum(int(a.size) * a.dtype.itemsize for a in prepped_args))
    cost = pl.CostEstimate(flops=flops, transcendentals=0,
                           bytes_accessed=bytes_accessed)

    out = pl.pallas_call(
        make_nn_v_kernel(num_hidden),
        out_shape=jax.ShapeDtypeStruct((Bp, 1), jnp.float32),
        grid=grid,
        in_specs=[x_spec] + w_specs,
        out_specs=o_spec,
        compiler_params=pltpu.CompilerParams(
            dimension_semantics=("parallel",)),
        cost_estimate=cost,
    )(x, *prepped_args)

    # .squeeze(1) from the PyTorch forward, dropping any batch padding.
    return out[:B, 0]


def init_params(key, in_size, layers):
    """Deterministic PyTorch-style init: U(-1/sqrt(fan_in), 1/sqrt(fan_in))."""
    dims = [in_size] + list(layers) + [1]
    params = []
    for i in range(len(dims) - 1):
        fan_in, fan_out = dims[i], dims[i + 1]
        key, kw, kb = jax.random.split(key, 3)
        bound = 1.0 / jnp.sqrt(jnp.float32(fan_in))
        W = jax.random.uniform(kw, (fan_out, fan_in), jnp.float32, -bound, bound)
        b = jax.random.uniform(kb, (fan_out,), jnp.float32, -bound, bound)
        params.append((W, b))
    return params


def reference_forward(x, params):
    h = x
    n = len(params)
    for i, (W, b) in enumerate(params):
        h = h @ W.T + b
        if i < n - 1:
            h = jnp.where(h > 0, h, NEG_SLOPE * h)
    return h[:, 0]


if __name__ == "__main__":
    key = jax.random.PRNGKey(0)
    in_size = 32
    hidden_layers = [64, 32]

    kx, kp, kx2 = jax.random.split(key, 3)
    params = init_params(kp, in_size, hidden_layers)
    prepped = prepare_params(params)   # one-time prep (transpose + lane padding)

    # main test: batch divisible by 8
    batch = 8
    x = jax.random.normal(kx, (batch, in_size), jnp.float32)
    y = nn_v_forward(x, prepped)
    jax.block_until_ready(y)
    y_ref = reference_forward(x, params)
    assert y.shape == (batch,)
    assert jnp.all(jnp.isfinite(y))
    assert jnp.allclose(y, y_ref, atol=1e-5, rtol=1e-5)

    # odd batch: exercises the zero-row padding path
    batch2 = 5
    x2 = jax.random.normal(kx2, (batch2, in_size), jnp.float32)
    y2 = nn_v_forward(x2, prepped)
    jax.block_until_ready(y2)
    y2_ref = reference_forward(x2, params)
    assert y2.shape == (batch2,)
    assert jnp.all(jnp.isfinite(y2))
    assert jnp.allclose(y2, y2_ref, atol=1e-5, rtol=1e-5)

    print("KERNEL_OK")
</pallas_src>

<mosaic_0001>
module attributes {stable_mosaic.version = 11 : i64} {
  func.func @kernel(%arg0: i32, %arg1: memref<8x32xf32, #tpu.memory_space<vmem>>, %arg2: memref<32x128xf32, #tpu.memory_space<vmem>>, %arg3: memref<1x128xf32, #tpu.memory_space<vmem>>, %arg4: memref<128x128xf32, #tpu.memory_space<vmem>>, %arg5: memref<1x128xf32, #tpu.memory_space<vmem>>, %arg6: memref<1x128xf32, #tpu.memory_space<vmem>>, %arg7: memref<1x1xf32, #tpu.memory_space<vmem>>, %arg8: memref<8x1xf32, #tpu.memory_space<vmem>>) attributes {dimension_semantics = [#tpu.dimension_semantics<parallel>], iteration_bounds = array<i64: 1>, scalar_prefetch = 0 : i64, scratch_operands = 0 : i64, tpu.core_type = #tpu.core_type<tc>, window_params = [{transform_indices = @transform_0, window_bounds = array<i64: 8, 32>}, {pipeline_mode = #tpu.pipeline_mode<synchronous>, transform_indices = @transform_1, window_bounds = array<i64: 32, 128>}, {pipeline_mode = #tpu.pipeline_mode<synchronous>, transform_indices = @transform_2, window_bounds = array<i64: 1, 128>}, {pipeline_mode = #tpu.pipeline_mode<synchronous>, transform_indices = @transform_3, window_bounds = array<i64: 128, 128>}, {pipeline_mode = #tpu.pipeline_mode<synchronous>, transform_indices = @transform_4, window_bounds = array<i64: 1, 128>}, {pipeline_mode = #tpu.pipeline_mode<synchronous>, transform_indices = @transform_5, window_bounds = array<i64: 1, 128>}, {pipeline_mode = #tpu.pipeline_mode<synchronous>, transform_indices = @transform_6, window_bounds = array<i64: 1, 1>}, {transform_indices = @transform_7, window_bounds = array<i64: 8, 1>}]} {
    %c0 = arith.constant 0 : index
    %c0_0 = arith.constant 0 : index
    %0 = vector.load %arg1[%c0, %c0_0] : memref<8x32xf32, #tpu.memory_space<vmem>>, vector<8x32xf32>
    %c0_1 = arith.constant 0 : index
    %c0_2 = arith.constant 0 : index
    %1 = vector.load %arg2[%c0_1, %c0_2] : memref<32x128xf32, #tpu.memory_space<vmem>>, vector<32x128xf32>
    %cst = arith.constant dense<0.000000e+00> : vector<8x128xf32>
    %2 = tpu.matmul %0, %1, %cst {dimension_numbers = #tpu.dot_dimension_numbers<[1], [0], [0], [1], [0, 0, 1, 1], [], []>} : vector<8x32xf32>, vector<32x128xf32>, vector<8x128xf32> -> vector<8x128xf32>
    %c0_3 = arith.constant 0 : index
    %c0_4 = arith.constant 0 : index
    %3 = vector.load %arg3[%c0_3, %c0_4] : memref<1x128xf32, #tpu.memory_space<vmem>>, vector<1x128xf32>
    %4 = vector.broadcast %3 : vector<1x128xf32> to vector<8x128xf32>
    %5 = arith.addf %2, %4 : vector<8x128xf32>
    %cst_5 = arith.constant 0.000000e+00 : f32
    %6 = vector.broadcast %cst_5 : f32 to vector<8x128xf32>
    %7 = arith.cmpf ogt, %5, %6 : vector<8x128xf32>
    %cst_6 = arith.constant 0.00999999977 : f32
    %8 = vector.broadcast %cst_6 : f32 to vector<8x128xf32>
    %9 = arith.mulf %8, %5 : vector<8x128xf32>
    %10 = arith.select %7, %5, %9 : vector<8x128xi1>, vector<8x128xf32>
    %c0_7 = arith.constant 0 : index
    %c0_8 = arith.constant 0 : index
    %11 = vector.load %arg4[%c0_7, %c0_8] : memref<128x128xf32, #tpu.memory_space<vmem>>, vector<128x128xf32>
    %cst_9 = arith.constant dense<0.000000e+00> : vector<8x128xf32>
    %12 = tpu.matmul %10, %11, %cst_9 {dimension_numbers = #tpu.dot_dimension_numbers<[1], [0], [0], [1], [0, 0, 1, 1], [], []>} : vector<8x128xf32>, vector<128x128xf32>, vector<8x128xf32> -> vector<8x128xf32>
    %c0_10 = arith.constant 0 : index
    %c0_11 = arith.constant 0 : index
    %13 = vector.load %arg5[%c0_10, %c0_11] : memref<1x128xf32, #tpu.memory_space<vmem>>, vector<1x128xf32>
    %14 = vector.broadcast %13 : vector<1x128xf32> to vector<8x128xf32>
    %15 = arith.addf %12, %14 : vector<8x128xf32>
    %cst_12 = arith.constant 0.000000e+00 : f32
    %16 = vector.broadcast %cst_12 : f32 to vector<8x128xf32>
    %17 = arith.cmpf ogt, %15, %16 : vector<8x128xf32>
    %cst_13 = arith.constant 0.00999999977 : f32
    %18 = vector.broadcast %cst_13 : f32 to vector<8x128xf32>
    %19 = arith.mulf %18, %15 : vector<8x128xf32>
    %20 = arith.select %17, %15, %19 : vector<8x128xi1>, vector<8x128xf32>
    %c0_14 = arith.constant 0 : index
    %c0_15 = arith.constant 0 : index
    %21 = vector.load %arg6[%c0_14, %c0_15] : memref<1x128xf32, #tpu.memory_space<vmem>>, vector<1x128xf32>
    %22 = vector.broadcast %21 : vector<1x128xf32> to vector<8x128xf32>
    %23 = arith.mulf %20, %22 : vector<8x128xf32>
    %cst_16 = arith.constant dense<0.000000e+00> : vector<8xf32>
    %24 = vector.multi_reduction <add>, %23, %cst_16 [1] : vector<8x128xf32> to vector<8xf32>
    %25 = vector.shape_cast %24 : vector<8xf32> to vector<8x1xf32>
    %c0_17 = arith.constant 0 : index
    %c0_18 = arith.constant 0 : index
    %26 = vector.load %arg7[%c0_17, %c0_18] : memref<1x1xf32, #tpu.memory_space<vmem>>, vector<1x1xf32>
    %27 = vector.broadcast %26 : vector<1x1xf32> to vector<8x1xf32>
    %28 = arith.addf %25, %27 : vector<8x1xf32>
    %c0_19 = arith.constant 0 : index
    %c0_20 = arith.constant 0 : index
    %29 = vector.load %arg8[%c0_19, %c0_20] : memref<8x1xf32, #tpu.memory_space<vmem>>, vector<8x1xf32>
    tpu.vector_store %arg8[%c0_19, %c0_20], %28 {strides = array<i32>} : memref<8x1xf32, #tpu.memory_space<vmem>>, vector<8x1xf32>,
    return
  }
  func.func @transform_0(%arg0: i32) -> (i32, i32) {
    %c0_i32 = arith.constant 0 : i32
    %c0_i32_0 = arith.constant 0 : i32
    return %arg0, %c0_i32 : i32, i32
  }
  func.func @transform_1(%arg0: i32) -> (i32, i32) {
    %c0_i32 = arith.constant 0 : i32
    %c0_i32_0 = arith.constant 0 : i32
    %c0_i32_1 = arith.constant 0 : i32
    return %c0_i32, %c0_i32_0 : i32, i32
  }
  func.func @transform_2(%arg0: i32) -> (i32, i32) {
    %c0_i32 = arith.constant 0 : i32
    %c0_i32_0 = arith.constant 0 : i32
    %c0_i32_1 = arith.constant 0 : i32
    return %c0_i32, %c0_i32_0 : i32, i32
  }
  func.func @transform_3(%arg0: i32) -> (i32, i32) {
    %c0_i32 = arith.constant 0 : i32
    %c0_i32_0 = arith.constant 0 : i32
    %c0_i32_1 = arith.constant 0 : i32
    return %c0_i32, %c0_i32_0 : i32, i32
  }
  func.func @transform_4(%arg0: i32) -> (i32, i32) {
    %c0_i32 = arith.constant 0 : i32
    %c0_i32_0 = arith.constant 0 : i32
    %c0_i32_1 = arith.constant 0 : i32
    return %c0_i32, %c0_i32_0 : i32, i32
  }
  func.func @transform_5(%arg0: i32) -> (i32, i32) {
    %c0_i32 = arith.constant 0 : i32
    %c0_i32_0 = arith.constant 0 : i32
    %c0_i32_1 = arith.constant 0 : i32
    return %c0_i32, %c0_i32_0 : i32, i32
  }
  func.func @transform_6(%arg0: i32) -> (i32, i32) {
    %c0_i32 = arith.constant 0 : i32
    %c0_i32_0 = arith.constant 0 : i32
    %c0_i32_1 = arith.constant 0 : i32
    return %c0_i32, %c0_i32_0 : i32, i32
  }
  func.func @transform_7(%arg0: i32) -> (i32, i32) {
    %c0_i32 = arith.constant 0 : i32
    %c0_i32_0 = arith.constant 0 : i32
    return %arg0, %c0_i32 : i32, i32
  }
}

</mosaic_0001>

<llo_original>
// kernel: nn_v_forward.1
$region0: #{nn_v_forward.1}
  #allocation0 [shape = 'u32[]', space=smem, size = 0x4, offset = 0x4, fixed_abs, tag = 'smem constant byte address 0x4 - core index']
  #allocation1 [shape = 'u32[72,128]{1,0:T(1,128)}', space=vmem, size = 0x9000, scoped, tag = 'internal scratch']
  #allocation2 [shape = 'f32[1,1]{1,0:T(1,128)S(1)}', space=vmem, size = 0x200, scoped, tag = 'scoped memory for nn_v_forward.1']
  %s0 = inlined_call_operand.hbm [shape: f32[8,32], index: 0, kind: input, shape index: {}]
  %s1 = inlined_call_operand.hbm [shape: f32[32,128], index: 1, kind: input, shape index: {}]
  %s2 = inlined_call_operand.vmem [shape: f32[1,128], index: 2, kind: input, shape index: {}]
  %s3 = inlined_call_operand.hbm [shape: f32[128,128], index: 3, kind: input, shape index: {}]
  %s4 = inlined_call_operand.vmem [shape: f32[1,128], index: 4, kind: input, shape index: {}]
  %s5 = inlined_call_operand.vmem [shape: f32[1,128], index: 5, kind: input, shape index: {}]
  %s6 = inlined_call_operand.<no memory space> [shape: f32[1,1], index: 6, kind: input, shape index: {}]
  %s7 = inlined_call_operand.vmem [shape: f32[8,1], index: 7, kind: output, shape index: {}]
  %s8 = sld [smem:[#allocation0]]
  $region50: #{nn_v_forward.1} parent=0
    _
  %s10 = ssub.s32 1, %s8
  %s11 = scalar_select 0, %s10, %s8
  %v12 = vstv %s6
  %13 = vst [vmem:[#allocation2] sm:$0x1] %v12
  $region1: #{nn_v_forward.1} parent=0
    #allocation3 [shape = 'u8[4096]{0}', space=vmem, size = 0x1000, scoped, tag = 'input window, operand 0, single buffered']
    #allocation4 [shape = 's32[1]{0}', space=sflag, size = 0x4, scoped, tag = 'scoped memory for nn_v_forward.1']
    #allocation5 [shape = 'u8[16384]{0}', space=vmem, size = 0x4000, scoped, tag = 'input window, operand 1, single buffered']
    #allocation6 [shape = 's32[1]{0}', space=sflag, size = 0x4, scoped, tag = 'scoped memory for nn_v_forward.1']
    #allocation7 [shape = 'u8[65536]{0}', space=vmem, size = 0x10000, scoped, tag = 'input window, operand 3, single buffered']
    %14 = vsyncpa [#allocation4], 0
    %15 = vsyncpa [#allocation6], 0
    // Predicated region
    $region2: #{nn_v_forward.1} parent=1 // pred_check
      _
    $region3: #{nn_v_forward.1} parent=1 // pred_check_branch
      %17 = sbr.rel (0) target = $region5
    $region4: #{nn_v_forward.1} parent=1 // pred_region
      %19 = vsyncadd [#allocation4], 0
      %s21 = sshll.u32 %s0, 4
      %s22 = int_to_ptr.hbm [resolvable:$true] %s21
      %s23 = sshll.u32 [#allocation3], 4
      %s24 = int_to_ptr.vmem [resolvable:$true] %s23
      %26 = dma.hbm_to_vmem [thread:$0]  %s22, 128, %s24, [#allocation4]
    $region5: #{nn_v_forward.1} parent=1 // pred_fallthru
      _
    // Predicated region
    $region6: #{nn_v_forward.1} parent=1 // pred_check
      _
    $region7: #{nn_v_forward.1} parent=1 // pred_check_branch
      %28 = sbr.rel (0) target = $region9
    $region8: #{nn_v_forward.1} parent=1 // pred_region
      %30 = vsyncadd [#allocation6], 0
      %s31 = sshll.u32 %s1, 4
      %s32 = int_to_ptr.hbm [resolvable:$true] %s31
      %s33 = sshll.u32 [#allocation5], 4
      %s34 = int_to_ptr.vmem [resolvable:$true] %s33
      %39 = dma.hbm_to_vmem [thread:$0]  %s32, 512, %s34, [#allocation6], 128, 128, 8
    $region9: #{nn_v_forward.1} parent=1 // pred_fallthru
      _
    // Predicated region
    $region10: #{nn_v_forward.1} parent=1 // pred_check
      _
    $region11: #{nn_v_forward.1} parent=1 // pred_check_branch
      %41 = sbr.rel (0) target = $region13
    $region12: #{nn_v_forward.1} parent=1 // pred_region
      _
    $region13: #{nn_v_forward.1} parent=1 // pred_fallthru
      _
    // Predicated region
    $region14: #{nn_v_forward.1} parent=1 // pred_check
      _
    $region15: #{nn_v_forward.1} parent=1 // pred_check_branch
      %43 = sbr.rel (0) target = $region17
    $region16: #{nn_v_forward.1} parent=1 // pred_region
      %45 = vsyncadd [#allocation6], 0
      %s46 = sshll.u32 %s3, 4
      %s47 = int_to_ptr.hbm [resolvable:$true] %s46
      %s48 = sshll.u32 [#allocation7], 4
      %s49 = int_to_ptr.vmem [resolvable:$true] %s48
      %54 = dma.hbm_to_vmem [thread:$0]  %s47, 2048, %s49, [#allocation6], 128, 128, 8
    $region17: #{nn_v_forward.1} parent=1 // pred_fallthru
      _
    // Predicated region
    $region18: #{nn_v_forward.1} parent=1 // pred_check
      _
    $region19: #{nn_v_forward.1} parent=1 // pred_check_branch
      %56 = sbr.rel (0) target = $region21
    $region20: #{nn_v_forward.1} parent=1 // pred_region
      _
    $region21: #{nn_v_forward.1} parent=1 // pred_fallthru
      _
    // Predicated region
    $region22: #{nn_v_forward.1} parent=1 // pred_check
      _
    $region23: #{nn_v_forward.1} parent=1 // pred_check_branch
      %58 = sbr.rel (0) target = $region25
    $region24: #{nn_v_forward.1} parent=1 // pred_region
      _
    $region25: #{nn_v_forward.1} parent=1 // pred_fallthru
      _
    // Predicated region
    $region26: #{nn_v_forward.1} parent=1 // pred_check
      _
    $region27: #{nn_v_forward.1} parent=1 // pred_check_branch
      %60 = sbr.rel (0) target = $region29
    $region28: #{nn_v_forward.1} parent=1 // pred_region
      _
    $region29: #{nn_v_forward.1} parent=1 // pred_fallthru
      _
    // Predicated region
    $region30: #{nn_v_forward.1} parent=1 // pred_check
      _
    $region31: #{nn_v_forward.1} parent=1 // pred_check_branch
      %62 = sbr.rel (0) target = $region33
    $region32: #{nn_v_forward.1} parent=1 // pred_region
      %64 = dma.done [#allocation4], 128
    $region33: #{nn_v_forward.1} parent=1 // pred_fallthru
      _
    // Predicated region
    $region34: #{nn_v_forward.1} parent=1 // pred_check
      _
    $region35: #{nn_v_forward.1} parent=1 // pred_check_branch
      %66 = sbr.rel (0) target = $region37
    $region36: #{nn_v_forward.1} parent=1 // pred_region
      %68 = dma.done [#allocation6], 512
    $region37: #{nn_v_forward.1} parent=1 // pred_fallthru
      _
    // Predicated region
    $region38: #{nn_v_forward.1} parent=1 // pred_check
      _
    $region39: #{nn_v_forward.1} parent=1 // pred_check_branch
      %70 = sbr.rel (0) target = $region41
    $region40: #{nn_v_forward.1} parent=1 // pred_region
      %72 = dma.done [#allocation6], 2048
    $region41: #{nn_v_forward.1} parent=1 // pred_fallthru
      _
    %v73 = vld [vmem:[#allocation3] sm:$0xff]
    %v74 = vld [vmem:[#allocation5] sm:$0xff]
    %v75 = vld [vmem:[#allocation5 + $0x8] sm:$0xff]
    %v76 = vld [vmem:[#allocation5 + $0x10] sm:$0xff]
    %v77 = vld [vmem:[#allocation5 + $0x18] sm:$0xff]
    %v78 = vld [vmem:[%s2] sm:$0x1]
    %v80 = vperm.slane %v78, 0
    %vm82 = vcmask 261120
    %v84 = vsel %vm82, %v73, 0
    %86 = vmatpush.msra.mxu0 0.0
    %87 = vmatpush.msra.mxu0 0.0
    %88 = vmatpush.msra.mxu0 0.0
    %89 = vmatpush.msra.mxu0 0.0
    %90 = vmatpush.msra.mxu0 0.0
    %91 = vmatpush.msra.mxu0 0.0
    %92 = vmatpush.msra.mxu0 0.0
    %93 = vmatpush.msra.mxu0 0.0
    %94 = vmatpush.msra.mxu0 0.0
    %95 = vmatpush.msra.mxu0 0.0
    %96 = vmatpush.msra.mxu0 0.0
    %97 = vmatpush.msra.mxu0 0.0
    %98 = vmatpush.msra.mxu0 %v77
    %99 = vmatpush.msra.mxu0 %v76
    %100 = vmatpush.msra.mxu0 %v75
    %101 = vmatpush.msra.mxu0 %v74
    %102 = vmatmul.f32.gmra.mxu0 %v84
    %v103 = vpop.f32.mrf.mxu0
    %v104 = vadd.f32 %v80, %v103
    %105 = vdwg.mxu0
    %vm106 = vcmp.gt.f32.partialorder %v104, 0.0
    %v107 = vmul.f32 %v104, 0.01
    %v108 = vsel %vm106, %v104, %v107
    %v109 = vld [vmem:[#allocation7] sm:$0xff]
    %v110 = vld [vmem:[#allocation7 + $0x8] sm:$0xff]
    %v111 = vld [vmem:[#allocation7 + $0x10] sm:$0xff]
    %v112 = vld [vmem:[#allocation7 + $0x18] sm:$0xff]
    %v113 = vld [vmem:[#allocation7 + $0x20] sm:$0xff]
    %v114 = vld [vmem:[#allocation7 + $0x28] sm:$0xff]
    %v115 = vld [vmem:[#allocation7 + $0x30] sm:$0xff]
    %v116 = vld [vmem:[#allocation7 + $0x38] sm:$0xff]
    %v117 = vld [vmem:[#allocation7 + $0x40] sm:$0xff]
    %v118 = vld [vmem:[#allocation7 + $0x48] sm:$0xff]
    %v119 = vld [vmem:[#allocation7 + $0x50] sm:$0xff]
    %v120 = vld [vmem:[#allocation7 + $0x58] sm:$0xff]
    %v121 = vld [vmem:[#allocation7 + $0x60] sm:$0xff]
    %v122 = vld [vmem:[#allocation7 + $0x68] sm:$0xff]
    %v123 = vld [vmem:[#allocation7 + $0x70] sm:$0xff]
    %v124 = vld [vmem:[#allocation7 + $0x78] sm:$0xff]
    %v125 = vld [vmem:[%s4] sm:$0x1]
    %v127 = vperm.slane %v125, 0
    %129 = vmatpush.msra.mxu0 %v124
    %130 = vmatpush.msra.mxu0 %v123
    %131 = vmatpush.msra.mxu0 %v122
    %132 = vmatpush.msra.mxu0 %v121
    %133 = vmatpush.msra.mxu0 %v120
    %134 = vmatpush.msra.mxu0 %v119
    %135 = vmatpush.msra.mxu0 %v118
    %136 = vmatpush.msra.mxu0 %v117
    %137 = vmatpush.msra.mxu0 %v116
    %138 = vmatpush.msra.mxu0 %v115
    %139 = vmatpush.msra.mxu0 %v114
    %140 = vmatpush.msra.mxu0 %v113
    %141 = vmatpush.msra.mxu0 %v112
    %142 = vmatpush.msra.mxu0 %v111
    %143 = vmatpush.msra.mxu0 %v110
    %144 = vmatpush.msra.mxu0 %v109
    %145 = vmatmul.f32.gmra.mxu0 %v108
    %v146 = vpop.f32.mrf.mxu0
    %v147 = vadd.f32 %v127, %v146
    %148 = vdwg.mxu0
    %vm149 = vcmp.gt.f32.partialorder %v147, 0.0
    %v150 = vmul.f32 %v147, 0.01
    %v151 = vsel %vm149, %v147, %v150
    %v152 = vld [vmem:[%s5] sm:$0x1]
    %v154 = vperm.slane %v152, 0
    %v156 = vmul.f32 %v151, %v154
    %157 = vadd.xlane.f32.xlu0 %v156
    %v158 = vpop.xlane.xlu0 %157
    %v159 = vld [vmem:[#allocation2] sm:$0x1]
    %v161 = vperm.slane %v159, 0
    %v163 = vadd.f32 %v158, %v161
    %vm164 = vcmask 7168
    %165 = vst.msk [vmem:[%s7] sm:$0xff] %vm164, %v163
    // Predicated region
    $region42: #{nn_v_forward.1} parent=1 // pred_check
      _
    $region43: #{nn_v_forward.1} parent=1 // pred_check_branch
      %167 = sbr.rel (0) target = $region45
    $region44: #{nn_v_forward.1} parent=1 // pred_region
      _
    $region45: #{nn_v_forward.1} parent=1 // pred_fallthru
      _
    // Predicated region
    $region46: #{nn_v_forward.1} parent=1 // pred_check
      _
    $region47: #{nn_v_forward.1} parent=1 // pred_check_branch
      %169 = sbr.rel (0) target = $region49
    $region48: #{nn_v_forward.1} parent=1 // pred_region
      _
    $region49: #{nn_v_forward.1} parent=1 // pred_fallthru
      _
    %170 = vsyncpa [#allocation4], 1
    %171 = vsyncpa [#allocation6], 1

</llo_original>
